<compile_context>
chip_gen: v7x
topology: tpu7x:2x2x1
jax: 0.10.0
libtpu: 0.0.40
codegen_flags: <defaults>
</compile_context>

<pallas_src>
import math

import jax
import jax.numpy as jnp
from jax.experimental import pallas as pl
from jax.experimental.pallas import tpu as pltpu


def _round_up(x, m):
    return ((x + m - 1) // m) * m


def _cdiv(a, b):
    return (a + b - 1) // b


# ------------------------------------------------------------------
# Fused kernel: tanh(pca) + squared-distance scoring for one entity tile
# ------------------------------------------------------------------
def _fused_pca_score_kernel(x_ref, w_ref, b_ref, lhs_xy_ref, lhs_y2_ref,
                            bias_ref, ent_ref, pred_ref):
    # ent = tanh(x @ W + b)                                   [TN, K*D]
    ent_ref[...] = jnp.tanh(
        jnp.dot(x_ref[...], w_ref[...], preferred_element_type=jnp.float32)
        + b_ref[...]).astype(ent_ref.dtype)

    # Feed the scoring dots from the output buffer (lets Mosaic alias the output
    # tile instead of materializing a second [TN, K*D] f32 temp).
    ent = ent_ref[...].astype(jnp.float32)

    # contract the K*D lane axis of both operands: [B, KD] x [TN, KD] -> [B, TN]
    dn = (((1,), (1,)), ((), ()))
    xy2 = jax.lax.dot_general(lhs_xy_ref[...], ent, dn,
                              preferred_element_type=jnp.float32)      # 2 * xy (factor-selected)
    y2 = jax.lax.dot_general(lhs_y2_ref[...], ent * ent, dn,
                             preferred_element_type=jnp.float32)       # |ent[n, rel[b]]|^2

    # score = gamma - (|obj|^2 + y2 - 2*xy) = bias + xy2 - y2
    pred_ref[...] = jax.nn.sigmoid(bias_ref[...] + xy2 - y2)


def _choose_tile_n(n, bsz, inp_dim, kd, tile_n_cap, vmem_budget_bytes):
    """Pick an entity tile size: big (amortize per-step overhead), >=4 grid steps
    when N allows it (megacore + pipelining), and within a VMEM budget."""
    n128 = _round_up(n, 128)
    # >= ~4 grid steps for 2 TCs x double-buffering, when N permits 128-aligned tiles.
    tile_n = min(tile_n_cap, _round_up(_cdiv(n128, 4), 128), n128)

    # Double-buffered per-row VMEM footprint (x last dim lane-pads 32 -> 128).
    i_pad = _round_up(inp_dim, 128)
    b_pad = _round_up(bsz, 8)
    per_row = 2 * 4 * (i_pad + kd + b_pad)          # x + ent + pred column, x2 buffers
    resident = 4 * (_round_up(inp_dim, 8) * kd + 2 * b_pad * kd + kd + b_pad)
    max_rows = max(128, (vmem_budget_bytes - resident) // max(per_row, 1))
    tile_n = min(tile_n, max(128, (max_rows // 128) * 128))
    return tile_n


def fused_pca_score(init_embed, w, b, lhs_xy, lhs_y2, bias, *, tile_n=None,
                    ent_dtype=jnp.float32, vmem_budget_bytes=20 * 1024 * 1024):
    n, i = init_embed.shape
    kd = w.shape[1]
    bsz = lhs_xy.shape[0]

    tile_cap = 4096 if tile_n is None else _round_up(tile_n, 128)
    tile_n = _choose_tile_n(n, bsz, i, kd, tile_cap, vmem_budget_bytes)

    # Pad the entity axis so it divides tile_n (padded rows are sliced off the outputs).
    n_pad = _round_up(n, tile_n)
    if n_pad != n:
        init_embed = jnp.pad(init_embed, ((0, n_pad - n), (0, 0)))

    cost = pl.CostEstimate(
        flops=int(2 * n_pad * i * kd + 4 * bsz * kd * n_pad),
        transcendentals=int(n_pad * kd),
        bytes_accessed=int(4 * (n_pad * i + i * kd + 2 * bsz * kd + bsz)
                           + n_pad * kd * jnp.dtype(ent_dtype).itemsize
                           + 4 * bsz * n_pad),
    )

    ent_flat, pred = pl.pallas_call(
        _fused_pca_score_kernel,
        out_shape=(jax.ShapeDtypeStruct((n_pad, kd), ent_dtype),
                   jax.ShapeDtypeStruct((bsz, n_pad), jnp.float32)),
        grid_spec=pltpu.PrefetchScalarGridSpec(
            num_scalar_prefetch=0,
            grid=(n_pad // tile_n,),
            in_specs=[
                pl.BlockSpec((tile_n, i), lambda g: (g, 0)),   # x tile
                pl.BlockSpec((i, kd), lambda g: (0, 0)),       # pca weight (resident)
                pl.BlockSpec((1, kd), lambda g: (0, 0)),       # pca bias
                pl.BlockSpec((bsz, kd), lambda g: (0, 0)),     # 2 * onehot⊙obj
                pl.BlockSpec((bsz, kd), lambda g: (0, 0)),     # onehot repeated over D
                pl.BlockSpec((bsz, 1), lambda g: (0, 0)),      # gamma - |obj|^2
            ],
            out_specs=(pl.BlockSpec((tile_n, kd), lambda g: (g, 0)),    # all_ent (flat)
                       pl.BlockSpec((bsz, tile_n), lambda g: (0, g))),  # pred (lane-dense)
        ),
        compiler_params=pltpu.CompilerParams(
            dimension_semantics=("parallel",)),
        cost_estimate=cost,
    )(init_embed, w, b.reshape(1, kd), lhs_xy, lhs_y2, bias)

    return ent_flat[:n], pred[:, :n]


# ------------------------------------------------------------------
# Full forward (batch-sized glue in plain JAX around the fused kernel)
# ------------------------------------------------------------------
def dozsl_agg_sub_forward(params, sub, rel, *, num_factors, gcn_dim, tile_n=None):
    w, b = params["pca_w"], params["pca_b"]
    init_embed = params["init_embed"]
    n = init_embed.shape[0]
    bsz = sub.shape[0]
    kd = num_factors * gcn_dim
    hp = jax.lax.Precision.HIGHEST

    # obj[b] = tanh(pca(init_embed[sub[b]]))[rel[b]] + init_rel[rel[b]]   (B rows only)
    sub_ent = jnp.tanh(jnp.dot(init_embed[sub], w, precision=hp) + b)       # [B, K*D]
    sub_ent = sub_ent.reshape(bsz, num_factors, gcn_dim)
    sub_sel = sub_ent[jnp.arange(bsz), rel, :]                              # sub_emb[i, rel[i]]
    rel_emb = jnp.take(params["init_rel"], rel, axis=0)                     # [B, D]
    obj = sub_sel + rel_emb                                                 # [B, D]

    # Fold the per-row factor selection (one-hot over rel) into the MXU LHS operands.
    onehot = jax.nn.one_hot(rel, num_factors, dtype=jnp.float32)            # [B, K]
    lhs_xy = 2.0 * (onehot[:, :, None] * obj[:, None, :]).reshape(bsz, kd)  # [B, K*D]
    lhs_y2 = jnp.repeat(onehot, gcn_dim, axis=1)                            # [B, K*D]
    bias = params["gamma"].reshape(1, 1) - jnp.sum(obj * obj, axis=-1, keepdims=True)  # [B, 1]

    all_ent_flat, pred = fused_pca_score(init_embed, w, b, lhs_xy, lhs_y2,
                                         bias, tile_n=tile_n)
    all_ent = all_ent_flat.reshape(n, num_factors, gcn_dim)
    corr = jnp.float32(0.0)          # test_base path returns 0.0
    return pred, corr, all_ent


# ------------------------------------------------------------------
# Pure-JAX reference mirroring the PyTorch forward (for verification)
# ------------------------------------------------------------------
def reference_forward(params, sub, rel, *, num_factors, gcn_dim):
    hp = jax.lax.Precision.HIGHEST
    x = jnp.tanh(jnp.dot(params["init_embed"], params["pca_w"], precision=hp)
                 + params["pca_b"])
    all_ent = x.reshape(-1, num_factors, gcn_dim)
    sub_emb = all_ent[sub]
    rel_emb = params["init_rel"][rel]
    b = sub.shape[0]
    sub_sel = sub_emb[jnp.arange(b), rel, :]
    obj = sub_sel + rel_emb
    obj_emb = jnp.tile(obj[:, None, :], (1, num_factors, 1))
    x2 = jnp.sum(obj_emb * obj_emb, axis=-1)
    y2 = jnp.sum(all_ent * all_ent, axis=-1)
    xy = jnp.einsum('bkf,nkf->bkn', obj_emb, all_ent, precision=hp)
    scores = params["gamma"] - (x2[:, :, None] + y2.T[None, :, :] - 2.0 * xy)
    x_sel = scores[jnp.arange(b), rel, :]
    return jax.nn.sigmoid(x_sel)


if __name__ == "__main__":
    # Small shapes consistent with the module; num_ent deliberately not a multiple of 128
    # to exercise the padded entity axis; auto tile selection gives a 4-step "parallel" grid.
    num_ent, init_dim, gcn_dim, num_factors = 1000, 32, 32, 4
    num_rel = 4      # rel indexes both init_rel rows and the factor axis -> rel < num_factors
    batch = 8
    init_gamma = 2.0

    key = jax.random.PRNGKey(0)
    ks = jax.random.split(key, 6)
    stdv = 1.0 / math.sqrt(num_factors * gcn_dim)   # SparseInputLinear.reset_parameters
    params = {
        "init_embed": jax.random.normal(ks[0], (num_ent, init_dim), jnp.float32),
        "init_rel": 0.1 * jax.random.normal(ks[1], (num_rel * 2, gcn_dim), jnp.float32),
        "pca_w": jax.random.uniform(ks[2], (init_dim, num_factors * gcn_dim),
                                    jnp.float32, -stdv, stdv),
        "pca_b": jax.random.uniform(ks[3], (num_factors * gcn_dim,),
                                    jnp.float32, -stdv, stdv),
        "gamma": jnp.full((1,), init_gamma, jnp.float32),
    }
    sub = jax.random.randint(ks[4], (batch,), 0, num_ent, dtype=jnp.int32)
    rel = jax.random.randint(ks[5], (batch,), 0, num_factors, dtype=jnp.int32)

    pred, corr, all_ent = dozsl_agg_sub_forward(
        params, sub, rel, num_factors=num_factors, gcn_dim=gcn_dim)
    pred = jax.block_until_ready(pred)

    ref = reference_forward(params, sub, rel, num_factors=num_factors, gcn_dim=gcn_dim)
    assert pred.shape == (batch, num_ent)
    assert all_ent.shape == (num_ent, num_factors, gcn_dim)
    assert bool(jnp.all(jnp.isfinite(pred)))
    max_err = float(jnp.max(jnp.abs(pred - ref)))
    assert max_err < 2e-2, f"max abs err {max_err}"
    print("KERNEL_OK")
</pallas_src>

<mosaic_0001>
module attributes {stable_mosaic.version = 11 : i64} {
  func.func @_fused_pca_score_kernel(%arg0: i32, %arg1: memref<256x32xf32, #tpu.memory_space<vmem>>, %arg2: memref<32x128xf32, #tpu.memory_space<vmem>>, %arg3: memref<1x128xf32, #tpu.memory_space<vmem>>, %arg4: memref<8x128xf32, #tpu.memory_space<vmem>>, %arg5: memref<8x128xf32, #tpu.memory_space<vmem>>, %arg6: memref<8x1xf32, #tpu.memory_space<vmem>>, %arg7: memref<256x128xf32, #tpu.memory_space<vmem>>, %arg8: memref<8x256xf32, #tpu.memory_space<vmem>>) attributes {dimension_semantics = [#tpu.dimension_semantics<parallel>], iteration_bounds = array<i64: 4>, scalar_prefetch = 0 : i64, scratch_operands = 0 : i64, tpu.core_type = #tpu.core_type<tc>, window_params = [{transform_indices = @transform_0, window_bounds = array<i64: 256, 32>}, {pipeline_mode = #tpu.pipeline_mode<synchronous>, transform_indices = @transform_1, window_bounds = array<i64: 32, 128>}, {pipeline_mode = #tpu.pipeline_mode<synchronous>, transform_indices = @transform_2, window_bounds = array<i64: 1, 128>}, {pipeline_mode = #tpu.pipeline_mode<synchronous>, transform_indices = @transform_3, window_bounds = array<i64: 8, 128>}, {pipeline_mode = #tpu.pipeline_mode<synchronous>, transform_indices = @transform_4, window_bounds = array<i64: 8, 128>}, {pipeline_mode = #tpu.pipeline_mode<synchronous>, transform_indices = @transform_5, window_bounds = array<i64: 8, 1>}, {transform_indices = @transform_6, window_bounds = array<i64: 256, 128>}, {transform_indices = @transform_7, window_bounds = array<i64: 8, 256>}]} {
    %c0 = arith.constant 0 : index
    %c0_0 = arith.constant 0 : index
    %0 = vector.load %arg1[%c0, %c0_0] : memref<256x32xf32, #tpu.memory_space<vmem>>, vector<256x32xf32>
    %c0_1 = arith.constant 0 : index
    %c0_2 = arith.constant 0 : index
    %1 = vector.load %arg2[%c0_1, %c0_2] : memref<32x128xf32, #tpu.memory_space<vmem>>, vector<32x128xf32>
    %cst = arith.constant dense<0.000000e+00> : vector<256x128xf32>
    %2 = tpu.matmul %0, %1, %cst {dimension_numbers = #tpu.dot_dimension_numbers<[1], [0], [0], [1], [0, 0, 1, 1], [], []>} : vector<256x32xf32>, vector<32x128xf32>, vector<256x128xf32> -> vector<256x128xf32>
    %c0_3 = arith.constant 0 : index
    %c0_4 = arith.constant 0 : index
    %3 = vector.load %arg3[%c0_3, %c0_4] : memref<1x128xf32, #tpu.memory_space<vmem>>, vector<1x128xf32>
    %4 = vector.broadcast %3 : vector<1x128xf32> to vector<256x128xf32>
    %5 = arith.addf %2, %4 : vector<256x128xf32>
    %6 = math.tanh %5 : vector<256x128xf32>
    %c0_5 = arith.constant 0 : index
    %c0_6 = arith.constant 0 : index
    %7 = vector.load %arg7[%c0_5, %c0_6] : memref<256x128xf32, #tpu.memory_space<vmem>>, vector<256x128xf32>
    tpu.vector_store %arg7[%c0_5, %c0_6], %6 {strides = array<i32>} : memref<256x128xf32, #tpu.memory_space<vmem>>, vector<256x128xf32>,
    %c0_7 = arith.constant 0 : index
    %c0_8 = arith.constant 0 : index
    %8 = vector.load %arg7[%c0_7, %c0_8] : memref<256x128xf32, #tpu.memory_space<vmem>>, vector<256x128xf32>
    %c0_9 = arith.constant 0 : index
    %c0_10 = arith.constant 0 : index
    %9 = vector.load %arg4[%c0_9, %c0_10] : memref<8x128xf32, #tpu.memory_space<vmem>>, vector<8x128xf32>
    %cst_11 = arith.constant dense<0.000000e+00> : vector<8x256xf32>
    %10 = tpu.matmul %9, %8, %cst_11 {dimension_numbers = #tpu.dot_dimension_numbers<[1], [1], [0], [0], [0, 0, 1, 0], [], []>} : vector<8x128xf32>, vector<256x128xf32>, vector<8x256xf32> -> vector<8x256xf32>
    %c0_12 = arith.constant 0 : index
    %c0_13 = arith.constant 0 : index
    %11 = vector.load %arg5[%c0_12, %c0_13] : memref<8x128xf32, #tpu.memory_space<vmem>>, vector<8x128xf32>
    %12 = arith.mulf %8, %8 : vector<256x128xf32>
    %cst_14 = arith.constant dense<0.000000e+00> : vector<8x256xf32>
    %13 = tpu.matmul %11, %12, %cst_14 {dimension_numbers = #tpu.dot_dimension_numbers<[1], [1], [0], [0], [0, 0, 1, 0], [], []>} : vector<8x128xf32>, vector<256x128xf32>, vector<8x256xf32> -> vector<8x256xf32>
    %c0_15 = arith.constant 0 : index
    %c0_16 = arith.constant 0 : index
    %14 = vector.load %arg6[%c0_15, %c0_16] : memref<8x1xf32, #tpu.memory_space<vmem>>, vector<8x1xf32>
    %15 = vector.broadcast %14 : vector<8x1xf32> to vector<8x256xf32>
    %16 = arith.addf %15, %10 : vector<8x256xf32>
    %17 = arith.subf %16, %13 : vector<8x256xf32>
    %18 = arith.negf %17 : vector<8x256xf32>
    %19 = math.exp %18 : vector<8x256xf32>
    %cst_17 = arith.constant 1.000000e+00 : f32
    %20 = vector.broadcast %cst_17 : f32 to vector<8x256xf32>
    %21 = arith.addf %20, %19 : vector<8x256xf32>
    %22 = arith.divf %20, %21 : vector<8x256xf32>
    %c0_18 = arith.constant 0 : index
    %c0_19 = arith.constant 0 : index
    %23 = vector.load %arg8[%c0_18, %c0_19] : memref<8x256xf32, #tpu.memory_space<vmem>>, vector<8x256xf32>
    tpu.vector_store %arg8[%c0_18, %c0_19], %22 {strides = array<i32>} : memref<8x256xf32, #tpu.memory_space<vmem>>, vector<8x256xf32>,
    return
  }
  func.func @transform_0(%arg0: i32) -> (i32, i32) {
    %c0_i32 = arith.constant 0 : i32
    %c0_i32_0 = arith.constant 0 : i32
    return %arg0, %c0_i32 : i32, i32
  }
  func.func @transform_1(%arg0: i32) -> (i32, i32) {
    %c0_i32 = arith.constant 0 : i32
    %c0_i32_0 = arith.constant 0 : i32
    %c0_i32_1 = arith.constant 0 : i32
    return %c0_i32, %c0_i32_0 : i32, i32
  }
  func.func @transform_2(%arg0: i32) -> (i32, i32) {
    %c0_i32 = arith.constant 0 : i32
    %c0_i32_0 = arith.constant 0 : i32
    %c0_i32_1 = arith.constant 0 : i32
    return %c0_i32, %c0_i32_0 : i32, i32
  }
  func.func @transform_3(%arg0: i32) -> (i32, i32) {
    %c0_i32 = arith.constant 0 : i32
    %c0_i32_0 = arith.constant 0 : i32
    %c0_i32_1 = arith.constant 0 : i32
    return %c0_i32, %c0_i32_0 : i32, i32
  }
  func.func @transform_4(%arg0: i32) -> (i32, i32) {
    %c0_i32 = arith.constant 0 : i32
    %c0_i32_0 = arith.constant 0 : i32
    %c0_i32_1 = arith.constant 0 : i32
    return %c0_i32, %c0_i32_0 : i32, i32
  }
  func.func @transform_5(%arg0: i32) -> (i32, i32) {
    %c0_i32 = arith.constant 0 : i32
    %c0_i32_0 = arith.constant 0 : i32
    %c0_i32_1 = arith.constant 0 : i32
    return %c0_i32, %c0_i32_0 : i32, i32
  }
  func.func @transform_6(%arg0: i32) -> (i32, i32) {
    %c0_i32 = arith.constant 0 : i32
    %c0_i32_0 = arith.constant 0 : i32
    return %arg0, %c0_i32 : i32, i32
  }
  func.func @transform_7(%arg0: i32) -> (i32, i32) {
    %c0_i32 = arith.constant 0 : i32
    %c0_i32_0 = arith.constant 0 : i32
    return %c0_i32, %arg0 : i32, i32
  }
}

</mosaic_0001>

<llo_original>
// kernel: tpu_custom_call.1
$region0: #{tpu_custom_call.1}
  #allocation0 [shape = 'u32[]', space=smem, size = 0x4, offset = 0x4, fixed_abs, tag = 'smem constant byte address 0x4 - core index']
  #allocation1 [shape = 'u32[144,128]{1,0:T(1,128)}', space=vmem, size = 0x12000, scoped, tag = 'internal scratch']
  %s0 = inlined_call_operand.vmem [shape: f32[1024,32], index: 0, kind: input, shape index: {}]
  %s1 = inlined_call_operand.vmem [shape: f32[32,128], index: 1, kind: input, shape index: {}]
  %s2 = inlined_call_operand.vmem [shape: f32[1,128], index: 2, kind: input, shape index: {}]
  %s3 = inlined_call_operand.vmem [shape: f32[8,128], index: 3, kind: input, shape index: {}]
  %s4 = inlined_call_operand.vmem [shape: f32[8,128], index: 4, kind: input, shape index: {}]
  %s5 = inlined_call_operand.vmem [shape: f32[8,1], index: 5, kind: input, shape index: {}]
  %s6 = inlined_call_operand.hbm [shape: f32[1024,128], index: 6, kind: output, shape index: {0}]
  %s7 = inlined_call_operand.hbm [shape: f32[8,1024], index: 7, kind: output, shape index: {1}]
  %8 = xla_tuple %s6, %s7
  %s9 = sld [smem:[#allocation0]]
  $region65: #{tpu_custom_call.1} parent=0
    _
  %s11 = ssub.s32 1, %s9
  %s12 = scalar_select 0, %s11, %s9
  $region1: #{tpu_custom_call.1} parent=0
    #allocation2 [shape = 'u8[262144]{0}', space=vmem, size = 0x40000, scoped, tag = 'output window, operand 0']
    #allocation3 [shape = 's32[2]{0}', space=sflag, size = 0x8, scoped, tag = 'scoped memory for tpu_custom_call.1']
    #allocation4 [shape = 'u8[16384]{0}', space=vmem, size = 0x4000, scoped, tag = 'output window, operand 1']
    #allocation5 [shape = 's32[2]{0}', space=sflag, size = 0x8, scoped, tag = 'scoped memory for tpu_custom_call.1']
    %13 = vsyncpa [#allocation3], 0
    %s14 = scalar_lea.sflag [#allocation3], 1
    %15 = vsyncpa %s14, 0
    %16 = vsyncpa [#allocation5], 0
    %s17 = scalar_lea.sflag [#allocation5], 1
    %18 = vsyncpa %s17, 0
    loop: start=0, step=1, limit=6
    $region2: #{tpu_custom_call.1} parent=1 // loop_pre_header
      _
    $region3: #{tpu_custom_call.1} parent=1 // loop_header
      %s20 = sphi 0, %s24
      %p21 = scmp.ge.s32.totalorder %s20, 6
      %s30 = sphi 0, %s32
      %s33 = sphi 0, %s30
      %s34 = sphi 0, %s33
      %s50 = sphi 0, %s34
      %s54 = sphi 0, %s54
      %s56 = sphi 0, %s54
      %s57 = sphi 0, %s56
      %s71 = sphi 0, %s57
      %s75 = sphi 0, %s75
      %s77 = sphi 0, %s75
      %s78 = sphi 0, %s77
      %s92 = sphi 0, %s78
      %s96 = sphi 0, %s96
      %s98 = sphi 0, %s96
      %s99 = sphi 0, %s98
      %s113 = sphi 0, %s99
      %s117 = sphi 0, %s117
      %s119 = sphi 0, %s117
      %s120 = sphi 0, %s119
      %s134 = sphi 0, %s120
      %s138 = sphi 0, %s138
      %s140 = sphi 0, %s138
      %s141 = sphi 0, %s140
      %s155 = sphi 0, %s141
      %s161 = sphi 0, %s163
      %s164 = sphi 0, %s161
      %s165 = sphi 0, %s164
      %s181 = sphi 0, %s165
      %s187 = sphi 0, %s189
      %s190 = sphi 0, %s187
      %s191 = sphi 0, %s190
      %s207 = sphi 0, %s191
    $region4: #{tpu_custom_call.1} parent=1 // loop_header_branch
      %23 = sbr.rel (%p21) target = $region8
    $region5: #{tpu_custom_call.1} parent=1 // loop_body
      %s25 = ssub.s32 %s20, 1
      %s26 = ssub.s32 %s20, 2
      %s27 = sadd.s32 %s20, 1
      %s28 = ssub.s32 %s20, %s27
      %p29 = scmp.eq.s32.totalorder %s28, 0
      %s31 = sadd.s32 %s30, 1
      %s32 = scalar_select %p29, %s30, %s31
      %p35 = pneg %p29
      %p36 = scmp.eq.s32.totalorder %s20, 3
      %p37 = por %p35, %p36
      %p38 = scmp.ne.s32.totalorder %s30, %s33
      %p39 = scmp.eq.s32.totalorder %s20, 0
      %p40 = por %p38, %p39
      %p41 = scmp.ne.s32.totalorder %s30, %s33
      %p42 = scmp.eq.s32.totalorder %s25, 3
      %p43 = por %p41, %p42
      %p44 = scmp.ne.s32.totalorder %s33, %s34
      %p45 = scmp.eq.s32.totalorder %s25, 0
      %p46 = por %p44, %p45
      %p47 = scmp.ne.s32.totalorder %s33, %s34
      %p48 = scmp.eq.s32.totalorder %s26, 3
      %p49 = por %p47, %p48
      %p51 = scmp.ne.s32.totalorder %s34, %s50
      %p52 = scmp.eq.s32.totalorder %s26, 0
      %p53 = por %p51, %p52
      %s55 = sadd.s32 %s54, 1
      %p58 = scmp.eq.s32.totalorder %s20, 3
      %p59 = scmp.ne.s32.totalorder %s54, %s56
      %p60 = scmp.eq.s32.totalorder %s20, 0
      %p61 = por %p59, %p60
      %p62 = scmp.ne.s32.totalorder %s54, %s56
      %p63 = scmp.eq.s32.totalorder %s25, 3
      %p64 = por %p62, %p63
      %p65 = scmp.ne.s32.totalorder %s56, %s57
      %p66 = scmp.eq.s32.totalorder %s25, 0
      %p67 = por %p65, %p66
      %p68 = scmp.ne.s32.totalorder %s56, %s57
      %p69 = scmp.eq.s32.totalorder %s26, 3
      %p70 = por %p68, %p69
      %p72 = scmp.ne.s32.totalorder %s57, %s71
      %p73 = scmp.eq.s32.totalorder %s26, 0
      %p74 = por %p72, %p73
      %s76 = sadd.s32 %s75, 1
      %p79 = scmp.eq.s32.totalorder %s20, 3
      %p80 = scmp.ne.s32.totalorder %s75, %s77
      %p81 = scmp.eq.s32.totalorder %s20, 0
      %p82 = por %p80, %p81
      %p83 = scmp.ne.s32.totalorder %s75, %s77
      %p84 = scmp.eq.s32.totalorder %s25, 3
      %p85 = por %p83, %p84
      %p86 = scmp.ne.s32.totalorder %s77, %s78
      %p87 = scmp.eq.s32.totalorder %s25, 0
      %p88 = por %p86, %p87
      %p89 = scmp.ne.s32.totalorder %s77, %s78
      %p90 = scmp.eq.s32.totalorder %s26, 3
      %p91 = por %p89, %p90
      %p93 = scmp.ne.s32.totalorder %s78, %s92
      %p94 = scmp.eq.s32.totalorder %s26, 0
      %p95 = por %p93, %p94
      %s97 = sadd.s32 %s96, 1
      %p100 = scmp.eq.s32.totalorder %s20, 3
      %p101 = scmp.ne.s32.totalorder %s96, %s98
      %p102 = scmp.eq.s32.totalorder %s20, 0
      %p103 = por %p101, %p102
      %p104 = scmp.ne.s32.totalorder %s96, %s98
      %p105 = scmp.eq.s32.totalorder %s25, 3
      %p106 = por %p104, %p105
      %p107 = scmp.ne.s32.totalorder %s98, %s99
      %p108 = scmp.eq.s32.totalorder %s25, 0
      %p109 = por %p107, %p108
      %p110 = scmp.ne.s32.totalorder %s98, %s99
      %p111 = scmp.eq.s32.totalorder %s26, 3
      %p112 = por %p110, %p111
      %p114 = scmp.ne.s32.totalorder %s99, %s113
      %p115 = scmp.eq.s32.totalorder %s26, 0
      %p116 = por %p114, %p115
      %s118 = sadd.s32 %s117, 1
      %p121 = scmp.eq.s32.totalorder %s20, 3
      %p122 = scmp.ne.s32.totalorder %s117, %s119
      %p123 = scmp.eq.s32.totalorder %s20, 0
      %p124 = por %p122, %p123
      %p125 = scmp.ne.s32.totalorder %s117, %s119
      %p126 = scmp.eq.s32.totalorder %s25, 3
      %p127 = por %p125, %p126
      %p128 = scmp.ne.s32.totalorder %s119, %s120
      %p129 = scmp.eq.s32.totalorder %s25, 0
      %p130 = por %p128, %p129
      %p131 = scmp.ne.s32.totalorder %s119, %s120
      %p132 = scmp.eq.s32.totalorder %s26, 3
      %p133 = por %p131, %p132
      %p135 = scmp.ne.s32.totalorder %s120, %s134
      %p136 = scmp.eq.s32.totalorder %s26, 0
      %p137 = por %p135, %p136
      %s139 = sadd.s32 %s138, 1
      %p142 = scmp.eq.s32.totalorder %s20, 3
      %p143 = scmp.ne.s32.totalorder %s138, %s140
      %p144 = scmp.eq.s32.totalorder %s20, 0
      %p145 = por %p143, %p144
      %p146 = scmp.ne.s32.totalorder %s138, %s140
      %p147 = scmp.eq.s32.totalorder %s25, 3
      %p148 = por %p146, %p147
      %p149 = scmp.ne.s32.totalorder %s140, %s141
      %p150 = scmp.eq.s32.totalorder %s25, 0
      %p151 = por %p149, %p150
      %p152 = scmp.ne.s32.totalorder %s140, %s141
      %p153 = scmp.eq.s32.totalorder %s26, 3
      %p154 = por %p152, %p153
      %p156 = scmp.ne.s32.totalorder %s141, %s155
      %p157 = scmp.eq.s32.totalorder %s26, 0
      %p158 = por %p156, %p157
      %s159 = ssub.s32 %s20, %s27
      %p160 = scmp.eq.s32.totalorder %s159, 0
      %s162 = sadd.s32 %s161, 1
      %s163 = scalar_select %p160, %s161, %s162
      %p166 = pneg %p160
      %p167 = scmp.eq.s32.totalorder %s20, 3
      %p168 = por %p166, %p167
      %p169 = scmp.ne.s32.totalorder %s161, %s164
      %p170 = scmp.eq.s32.totalorder %s20, 0
      %p171 = por %p169, %p170
      %p172 = scmp.ne.s32.totalorder %s161, %s164
      %p173 = scmp.eq.s32.totalorder %s25, 3
      %p174 = por %p172, %p173
      %p175 = scmp.ne.s32.totalorder %s164, %s165
      %p176 = scmp.eq.s32.totalorder %s25, 0
      %p177 = por %p175, %p176
      %p178 = scmp.ne.s32.totalorder %s164, %s165
      %p179 = scmp.eq.s32.totalorder %s26, 3
      %p180 = por %p178, %p179
      %p182 = scmp.ne.s32.totalorder %s165, %s181
      %p183 = scmp.eq.s32.totalorder %s26, 0
      %p184 = por %p182, %p183
      %s185 = ssub.s32 %s20, %s27
      %p186 = scmp.eq.s32.totalorder %s185, 0
      %s188 = sadd.s32 %s187, 1
      %s189 = scalar_select %p186, %s187, %s188
      %p192 = pneg %p186
      %p193 = scmp.eq.s32.totalorder %s20, 3
      %p194 = por %p192, %p193
      %p195 = scmp.ne.s32.totalorder %s187, %s190
      %p196 = scmp.eq.s32.totalorder %s20, 0
      %p197 = por %p195, %p196
      %p198 = scmp.ne.s32.totalorder %s187, %s190
      %p199 = scmp.eq.s32.totalorder %s25, 3
      %p200 = por %p198, %p199
      %p201 = scmp.ne.s32.totalorder %s190, %s191
      %p202 = scmp.eq.s32.totalorder %s25, 0
      %p203 = por %p201, %p202
      %p204 = scmp.ne.s32.totalorder %s190, %s191
      %p205 = scmp.eq.s32.totalorder %s26, 3
      %p206 = por %p204, %p205
      %p208 = scmp.ne.s32.totalorder %s191, %s207
      %p209 = scmp.eq.s32.totalorder %s26, 0
      %p210 = por %p208, %p209
      %p211 = scmp.le.s32.totalorder 1, %s20
      %p212 = scmp.lt.s32.totalorder %s20, 5
      %p213 = pnand %p211, %p212
      %p214 = pneg %p213
      // Predicated region
      $region9: #{tpu_custom_call.1} parent=5 // pred_check
        _
      $region10: #{tpu_custom_call.1} parent=5 // pred_check_branch
        %216 = sbr.rel (%p213) target = $region12
      $region11: #{tpu_custom_call.1} parent=5 // pred_region
        %s217 = ssub.s32 %s20, 1
        // Predicated region
        $region13: #{tpu_custom_call.1} parent=11 // pred_check
          %p218 = pneg %p67
        $region14: #{tpu_custom_call.1} parent=11 // pred_check_branch
          %220 = sbr.rel (%p218) target = $region16
        $region15: #{tpu_custom_call.1} parent=11 // pred_region
          _
        $region16: #{tpu_custom_call.1} parent=11 // pred_fallthru
          _
        // Predicated region
        $region17: #{tpu_custom_call.1} parent=11 // pred_check
          %p221 = pneg %p88
        $region18: #{tpu_custom_call.1} parent=11 // pred_check_branch
          %223 = sbr.rel (%p221) target = $region20
        $region19: #{tpu_custom_call.1} parent=11 // pred_region
          _
        $region20: #{tpu_custom_call.1} parent=11 // pred_fallthru
          _
        // Predicated region
        $region21: #{tpu_custom_call.1} parent=11 // pred_check
          %p224 = pneg %p109
        $region22: #{tpu_custom_call.1} parent=11 // pred_check_branch
          %226 = sbr.rel (%p224) target = $region24
        $region23: #{tpu_custom_call.1} parent=11 // pred_region
          _
        $region24: #{tpu_custom_call.1} parent=11 // pred_fallthru
          _
        // Predicated region
        $region25: #{tpu_custom_call.1} parent=11 // pred_check
          %p227 = pneg %p130
        $region26: #{tpu_custom_call.1} parent=11 // pred_check_branch
          %229 = sbr.rel (%p227) target = $region28
        $region27: #{tpu_custom_call.1} parent=11 // pred_region
          _
        $region28: #{tpu_custom_call.1} parent=11 // pred_fallthru
          _
        // Predicated region
        $region29: #{tpu_custom_call.1} parent=11 // pred_check
          %p230 = pneg %p151
        $region30: #{tpu_custom_call.1} parent=11 // pred_check_branch
          %232 = sbr.rel (%p230) target = $region32
        $region31: #{tpu_custom_call.1} parent=11 // pred_region
          _
        $region32: #{tpu_custom_call.1} parent=11 // pred_fallthru
          _
      $region12: #{tpu_custom_call.1} parent=5 // pred_fallthru
        _
      %p233 = scmp.lt.s32.totalorder %s20, 4
      // Predicated region
      $region33: #{tpu_custom_call.1} parent=5 // pred_check
        %p234 = pneg %p233
      $region34: #{tpu_custom_call.1} parent=5 // pred_check_branch
        %236 = sbr.rel (%p234) target = $region36
      $region35: #{tpu_custom_call.1} parent=5 // pred_region
        // Predicated region
        $region37: #{tpu_custom_call.1} parent=35 // pred_check
          %p237 = pneg %p40
        $region38: #{tpu_custom_call.1} parent=35 // pred_check_branch
          %239 = sbr.rel (%p237) target = $region40
        $region39: #{tpu_custom_call.1} parent=35 // pred_region
          %s240 = smul.u32 32, %s20
          %p241 = scmp.lt.s32.totalorder %s240, 127
          %s242 = scalar_select %p241, %s240, 127
          %s243 = smul.addr %s242, 8
          %s244 = scalar_lea.vmem %s0, %s243
          %s245 = smul.u32 32, %s20
        $region40: #{tpu_custom_call.1} parent=35 // pred_fallthru
          _
      $region36: #{tpu_custom_call.1} parent=5 // pred_fallthru
        _
      %p246 = scmp.le.s32.totalorder 1, %s20
      %p247 = scmp.lt.s32.totalorder %s20, 5
      %p248 = pnand %p246, %p247
      %p249 = pneg %p248
      // Predicated region
      $region41: #{tpu_custom_call.1} parent=5 // pred_check
        _
      $region42: #{tpu_custom_call.1} parent=5 // pred_check_branch
        %251 = sbr.rel (%p248) target = $region44
      $region43: #{tpu_custom_call.1} parent=5 // pred_region
        %s252 = ssub.s32 %s20, 1
        %s253 = smul.u32 32, %s25
        %p254 = scmp.lt.s32.totalorder %s253, 127
        %s255 = scalar_select %p254, %s253, 127
        %s256 = smul.addr %s255, 8
        %s257 = scalar_lea.vmem %s0, %s256
        %p258 = pneg %p46
        %p259 = pneg %p43
        %p260 = pneg %p67
        %p261 = pneg %p64
        %p262 = pneg %p88
        %p263 = pneg %p85
        %p264 = pneg %p109
        %p265 = pneg %p106
        %p266 = pneg %p130
        %p267 = pneg %p127
        %p268 = pneg %p151
        %p269 = pneg %p148
        %p270 = pneg %p177
        %p271 = pneg %p174
        %s272 = sand.u32 %s164, 1
        %s273 = scalar_lea.sflag [#allocation3], %s272
        %s274 = sand.u32 %s164, 1
        %s275 = smul.addr %s274, 256
        %s276 = scalar_lea.vmem [#allocation2], %s275
        %p277 = pneg %p203
        %p278 = pneg %p200
        %s279 = sand.u32 %s190, 1
        %s280 = scalar_lea.sflag [#allocation5], %s279
        %s281 = sand.u32 %s190, 1
        %s282 = smul.addr %s281, 16
        %s283 = scalar_lea.vmem [#allocation4], %s282
        %s284 = smul.u32 32, %s25
        %p285 = scmp.lt.s32.totalorder %s284, 127
        %s286 = scalar_select %p285, %s284, 127
        %s287 = smul.addr %s286, 8
        %s288 = scalar_lea.vmem %s0, %s287
        %s289 = smul.u32 32, %s25
        %s290 = smul.u32 32, %s25
        %s291 = smul.u32 2, %s25
        %v292 = vld [vmem:[%s288] sm:$0xff]
        %v293 = vld [vmem:[%s288 + $0x8] sm:$0xff]
        %v294 = vld [vmem:[%s288 + $0x10] sm:$0xff]
        %v295 = vld [vmem:[%s288 + $0x18] sm:$0xff]
        %v296 = vld [vmem:[%s288 + $0x20] sm:$0xff]
        %v297 = vld [vmem:[%s288 + $0x28] sm:$0xff]
        %v298 = vld [vmem:[%s288 + $0x30] sm:$0xff]
        %v299 = vld [vmem:[%s288 + $0x38] sm:$0xff]
        %v300 = vld [vmem:[%s288 + $0x40] sm:$0xff]
        %v301 = vld [vmem:[%s288 + $0x48] sm:$0xff]
        %v302 = vld [vmem:[%s288 + $0x50] sm:$0xff]
        %v303 = vld [vmem:[%s288 + $0x58] sm:$0xff]
        %v304 = vld [vmem:[%s288 + $0x60] sm:$0xff]
        %v305 = vld [vmem:[%s288 + $0x68] sm:$0xff]
        %v306 = vld [vmem:[%s288 + $0x70] sm:$0xff]
        %v307 = vld [vmem:[%s288 + $0x78] sm:$0xff]
        %v308 = vld [vmem:[%s288 + $0x80] sm:$0xff]
        %v309 = vld [vmem:[%s288 + $0x88] sm:$0xff]
        %v310 = vld [vmem:[%s288 + $0x90] sm:$0xff]
        %v311 = vld [vmem:[%s288 + $0x98] sm:$0xff]
        %v312 = vld [vmem:[%s288 + $0xa0] sm:$0xff]
        %v313 = vld [vmem:[%s288 + $0xa8] sm:$0xff]
        %v314 = vld [vmem:[%s288 + $0xb0] sm:$0xff]
        %v315 = vld [vmem:[%s288 + $0xb8] sm:$0xff]
        %v316 = vld [vmem:[%s288 + $0xc0] sm:$0xff]
        %v317 = vld [vmem:[%s288 + $0xc8] sm:$0xff]
        %v318 = vld [vmem:[%s288 + $0xd0] sm:$0xff]
        %v319 = vld [vmem:[%s288 + $0xd8] sm:$0xff]
        %v320 = vld [vmem:[%s288 + $0xe0] sm:$0xff]
        %v321 = vld [vmem:[%s288 + $0xe8] sm:$0xff]
        %v322 = vld [vmem:[%s288 + $0xf0] sm:$0xff]
        %v323 = vld [vmem:[%s288 + $0xf8] sm:$0xff]
        %v324 = vld [vmem:[%s1] sm:$0xff]
        %v325 = vld [vmem:[%s1 + $0x8] sm:$0xff]
        %v326 = vld [vmem:[%s1 + $0x10] sm:$0xff]
        %v327 = vld [vmem:[%s1 + $0x18] sm:$0xff]
        %v328 = vld [vmem:[%s2] sm:$0x1]
        %v330 = vlaneseq
        %v331 = vshrl.u32 %v330, 7
        %v332 = vsub.s32 0, %v331
        %v333 = vrot.slane %v328, %v332
        %vm335 = vcmask 261120
        %v337 = vsel %vm335, %v292, 0
        %v340 = vsel %vm335, %v293, 0
        %v343 = vsel %vm335, %v294, 0
        %v346 = vsel %vm335, %v295, 0
        %v349 = vsel %vm335, %v296, 0
        %v352 = vsel %vm335, %v297, 0
        %v355 = vsel %vm335, %v298, 0
        %v358 = vsel %vm335, %v299, 0
        %v361 = vsel %vm335, %v300, 0
        %v364 = vsel %vm335, %v301, 0
        %v367 = vsel %vm335, %v302, 0
        %v370 = vsel %vm335, %v303, 0
        %v373 = vsel %vm335, %v304, 0
        %v376 = vsel %vm335, %v305, 0
        %v379 = vsel %vm335, %v306, 0
        %v382 = vsel %vm335, %v307, 0
        %v385 = vsel %vm335, %v308, 0
        %v388 = vsel %vm335, %v309, 0
        %v391 = vsel %vm335, %v310, 0
        %v394 = vsel %vm335, %v311, 0
        %v397 = vsel %vm335, %v312, 0
        %v400 = vsel %vm335, %v313, 0
        %v403 = vsel %vm335, %v314, 0
        %v406 = vsel %vm335, %v315, 0
        %v409 = vsel %vm335, %v316, 0
        %v412 = vsel %vm335, %v317, 0
        %v415 = vsel %vm335, %v318, 0
        %v418 = vsel %vm335, %v319, 0
        %v421 = vsel %vm335, %v320, 0
        %v424 = vsel %vm335, %v321, 0
        %v427 = vsel %vm335, %v322, 0
        %v430 = vsel %vm335, %v323, 0
        %432 = vmatprep.subr.mxu0 0.0
        %433 = vmatpush1.msra.mxu0 %v324
        %434 = vmatprep.subr.mxu0 0.0
        %435 = vmatpush1.msra.mxu0 %v325
        %436 = vmatprep.subr.mxu0 0.0
        %437 = vmatpush1.msra.mxu0 %v326
        %438 = vmatprep.subr.mxu0 0.0
        %439 = vmatpush1.msra.mxu0 %v327
        %440 = vmatprep.subr.mxu0 0.0
        %441 = vmatpush1.msra.mxu0 0.0
        %442 = vmatprep.subr.mxu0 0.0
        %443 = vmatpush1.msra.mxu0 0.0
        %444 = vmatprep.subr.mxu0 0.0
        %445 = vmatpush1.msra.mxu0 0.0
        %446 = vmatprep.subr.mxu0 0.0
        %447 = vmatpush1.msra.mxu0 0.0
        %448 = vmatprep.subr.mxu0 0.0
        %449 = vmatpush1.msra.mxu0 0.0
        %450 = vmatprep.subr.mxu0 0.0
        %451 = vmatpush1.msra.mxu0 0.0
        %452 = vmatprep.subr.mxu0 0.0
        %453 = vmatpush1.msra.mxu0 0.0
        %454 = vmatprep.subr.mxu0 0.0
        %455 = vmatpush1.msra.mxu0 0.0
        %456 = vmatprep.subr.mxu0 0.0
        %457 = vmatpush1.msra.mxu0 0.0
        %458 = vmatprep.subr.mxu0 0.0
        %459 = vmatpush1.msra.mxu0 0.0
        %460 = vmatprep.subr.mxu0 0.0
        %461 = vmatpush1.msra.mxu0 0.0
        %462 = vmatprep.subr.mxu0 0.0
        %463 = vmatpush1.msra.mxu0 0.0
        %464 = vmatprep.subr.mxu0 0.0
        %465 = vmatpush1.msra.mxu0 0.0
        %466 = vmatprep.subr.mxu0 0.0
        %467 = vmatpush1.msra.mxu0 0.0
        %468 = vmatprep.subr.mxu0 0.0
        %469 = vmatpush1.msra.mxu0 0.0
        %470 = vmatprep.subr.mxu0 0.0
        %471 = vmatpush1.msra.mxu0 0.0
        %472 = vmatprep.subr.mxu0 0.0
        %473 = vmatpush1.msra.mxu0 0.0
        %474 = vmatprep.subr.mxu0 0.0
        %475 = vmatpush1.msra.mxu0 0.0
        %476 = vmatprep.subr.mxu0 0.0
        %477 = vmatpush1.msra.mxu0 0.0
        %478 = vmatprep.subr.mxu0 0.0
        %479 = vmatpush1.msra.mxu0 0.0
        %480 = vmatprep.subr.mxu0 0.0
        %481 = vmatpush1.msra.mxu0 0.0
        %482 = vmatprep.subr.mxu0 0.0
        %483 = vmatpush1.msra.mxu0 0.0
        %484 = vmatprep.subr.mxu0 0.0
        %485 = vmatpush1.msra.mxu0 0.0
        %486 = vmatprep.subr.mxu0 0.0
        %487 = vmatpush1.msra.mxu0 0.0
        %488 = vmatprep.subr.mxu0 0.0
        %489 = vmatpush1.msra.mxu0 0.0
        %490 = vmatprep.subr.mxu0 0.0
        %491 = vmatpush1.msra.mxu0 0.0
        %492 = vmatprep.subr.mxu0 0.0
        %493 = vmatpush1.msra.mxu0 0.0
        %494 = vmatprep.subr.mxu0 0.0
        %495 = vmatpush1.msra.mxu0 0.0
        %496 = vmatprep.mubr.f32.mxu0 0.0
        %497 = vmatmul.mubr.f32.gmra.mrb[0].mxu0 %v337
        %v498 = vpop.f32.mrb[0].mxu0
        %v499 = vadd.f32 %v333, %v498
        %v500 = vpop.f32.mrb[0].mxu0
        %501 = vmatprep.mubr.f32.mxu0 0.0
        %502 = vmatmul.mubr.f32.gmra.mrb[0].mxu0 %v340
        %v503 = vpop.f32.mrb[0].mxu0
        %v504 = vadd.f32 %v333, %v503
        %v505 = vpop.f32.mrb[0].mxu0
        %506 = vmatprep.mubr.f32.mxu0 0.0
        %507 = vmatmul.mubr.f32.gmra.mrb[0].mxu0 %v343
        %v508 = vpop.f32.mrb[0].mxu0
        %v509 = vadd.f32 %v333, %v508
        %v510 = vpop.f32.mrb[0].mxu0
        %511 = vmatprep.mubr.f32.mxu0 0.0
        %512 = vmatmul.mubr.f32.gmra.mrb[0].mxu0 %v346
        %v513 = vpop.f32.mrb[0].mxu0
        %v514 = vadd.f32 %v333, %v513
        %v515 = vpop.f32.mrb[0].mxu0
        %516 = vmatprep.mubr.f32.mxu0 0.0
        %517 = vmatmul.mubr.f32.gmra.mrb[0].mxu0 %v349
        %v518 = vpop.f32.mrb[0].mxu0
        %v519 = vadd.f32 %v333, %v518
        %v520 = vpop.f32.mrb[0].mxu0
        %521 = vmatprep.mubr.f32.mxu0 0.0
        %522 = vmatmul.mubr.f32.gmra.mrb[0].mxu0 %v352
        %v523 = vpop.f32.mrb[0].mxu0
        %v524 = vadd.f32 %v333, %v523
        %v525 = vpop.f32.mrb[0].mxu0
        %526 = vmatprep.mubr.f32.mxu0 0.0
        %527 = vmatmul.mubr.f32.gmra.mrb[0].mxu0 %v355
        %v528 = vpop.f32.mrb[0].mxu0
        %v529 = vadd.f32 %v333, %v528
        %v530 = vpop.f32.mrb[0].mxu0
        %531 = vmatprep.mubr.f32.mxu0 0.0
        %532 = vmatmul.mubr.f32.gmra.mrb[0].mxu0 %v358
        %v533 = vpop.f32.mrb[0].mxu0
        %v534 = vadd.f32 %v333, %v533
        %v535 = vpop.f32.mrb[0].mxu0
        %536 = vmatprep.mubr.f32.mxu0 0.0
        %537 = vmatmul.mubr.f32.gmra.mrb[0].mxu0 %v361
        %v538 = vpop.f32.mrb[0].mxu0
        %v539 = vadd.f32 %v333, %v538
        %v540 = vpop.f32.mrb[0].mxu0
        %541 = vmatprep.mubr.f32.mxu0 0.0
        %542 = vmatmul.mubr.f32.gmra.mrb[0].mxu0 %v364
        %v543 = vpop.f32.mrb[0].mxu0
        %v544 = vadd.f32 %v333, %v543
        %v545 = vpop.f32.mrb[0].mxu0
        %546 = vmatprep.mubr.f32.mxu0 0.0
        %547 = vmatmul.mubr.f32.gmra.mrb[0].mxu0 %v367
        %v548 = vpop.f32.mrb[0].mxu0
        %v549 = vadd.f32 %v333, %v548
        %v550 = vpop.f32.mrb[0].mxu0
        %551 = vmatprep.mubr.f32.mxu0 0.0
        %552 = vmatmul.mubr.f32.gmra.mrb[0].mxu0 %v370
        %v553 = vpop.f32.mrb[0].mxu0
        %v554 = vadd.f32 %v333, %v553
        %v555 = vpop.f32.mrb[0].mxu0
        %556 = vmatprep.mubr.f32.mxu0 0.0
        %557 = vmatmul.mubr.f32.gmra.mrb[0].mxu0 %v373
        %v558 = vpop.f32.mrb[0].mxu0
        %v559 = vadd.f32 %v333, %v558
        %v560 = vpop.f32.mrb[0].mxu0
        %561 = vmatprep.mubr.f32.mxu0 0.0
        %562 = vmatmul.mubr.f32.gmra.mrb[0].mxu0 %v376
        %v563 = vpop.f32.mrb[0].mxu0
        %v564 = vadd.f32 %v333, %v563
        %v565 = vpop.f32.mrb[0].mxu0
        %566 = vmatprep.mubr.f32.mxu0 0.0
        %567 = vmatmul.mubr.f32.gmra.mrb[0].mxu0 %v379
        %v568 = vpop.f32.mrb[0].mxu0
        %v569 = vadd.f32 %v333, %v568
        %v570 = vpop.f32.mrb[0].mxu0
        %571 = vmatprep.mubr.f32.mxu0 0.0
        %572 = vmatmul.mubr.f32.gmra.mrb[0].mxu0 %v382
        %v573 = vpop.f32.mrb[0].mxu0
        %v574 = vadd.f32 %v333, %v573
        %v575 = vpop.f32.mrb[0].mxu0
        %576 = vmatprep.mubr.f32.mxu0 0.0
        %577 = vmatmul.mubr.f32.gmra.mrb[0].mxu0 %v385
        %v578 = vpop.f32.mrb[0].mxu0
        %v579 = vadd.f32 %v333, %v578
        %v580 = vpop.f32.mrb[0].mxu0
        %581 = vmatprep.mubr.f32.mxu0 0.0
        %582 = vmatmul.mubr.f32.gmra.mrb[0].mxu0 %v388
        %v583 = vpop.f32.mrb[0].mxu0
        %v584 = vadd.f32 %v333, %v583
        %v585 = vpop.f32.mrb[0].mxu0
        %586 = vmatprep.mubr.f32.mxu0 0.0
        %587 = vmatmul.mubr.f32.gmra.mrb[0].mxu0 %v391
        %v588 = vpop.f32.mrb[0].mxu0
        %v589 = vadd.f32 %v333, %v588
        %v590 = vpop.f32.mrb[0].mxu0
        %591 = vmatprep.mubr.f32.mxu0 0.0
        %592 = vmatmul.mubr.f32.gmra.mrb[0].mxu0 %v394
        %v593 = vpop.f32.mrb[0].mxu0
        %v594 = vadd.f32 %v333, %v593
        %v595 = vpop.f32.mrb[0].mxu0
        %596 = vmatprep.mubr.f32.mxu0 0.0
        %597 = vmatmul.mubr.f32.gmra.mrb[0].mxu0 %v397
        %v598 = vpop.f32.mrb[0].mxu0
        %v599 = vadd.f32 %v333, %v598
        %v600 = vpop.f32.mrb[0].mxu0
        %601 = vmatprep.mubr.f32.mxu0 0.0
        %602 = vmatmul.mubr.f32.gmra.mrb[0].mxu0 %v400
        %v603 = vpop.f32.mrb[0].mxu0
        %v604 = vadd.f32 %v333, %v603
        %v605 = vpop.f32.mrb[0].mxu0
        %606 = vmatprep.mubr.f32.mxu0 0.0
        %607 = vmatmul.mubr.f32.gmra.mrb[0].mxu0 %v403
        %v608 = vpop.f32.mrb[0].mxu0
        %v609 = vadd.f32 %v333, %v608
        %v610 = vpop.f32.mrb[0].mxu0
        %611 = vmatprep.mubr.f32.mxu0 0.0
        %612 = vmatmul.mubr.f32.gmra.mrb[0].mxu0 %v406
        %v613 = vpop.f32.mrb[0].mxu0
        %v614 = vadd.f32 %v333, %v613
        %v615 = vpop.f32.mrb[0].mxu0
        %616 = vmatprep.mubr.f32.mxu0 0.0
        %617 = vmatmul.mubr.f32.gmra.mrb[0].mxu0 %v409
        %v618 = vpop.f32.mrb[0].mxu0
        %v619 = vadd.f32 %v333, %v618
        %v620 = vpop.f32.mrb[0].mxu0
        %621 = vmatprep.mubr.f32.mxu0 0.0
        %622 = vmatmul.mubr.f32.gmra.mrb[0].mxu0 %v412
        %v623 = vpop.f32.mrb[0].mxu0
        %v624 = vadd.f32 %v333, %v623
        %v625 = vpop.f32.mrb[0].mxu0
        %626 = vmatprep.mubr.f32.mxu0 0.0
        %627 = vmatmul.mubr.f32.gmra.mrb[0].mxu0 %v415
        %v628 = vpop.f32.mrb[0].mxu0
        %v629 = vadd.f32 %v333, %v628
        %v630 = vpop.f32.mrb[0].mxu0
        %631 = vmatprep.mubr.f32.mxu0 0.0
        %632 = vmatmul.mubr.f32.gmra.mrb[0].mxu0 %v418
        %v633 = vpop.f32.mrb[0].mxu0
        %v634 = vadd.f32 %v333, %v633
        %v635 = vpop.f32.mrb[0].mxu0
        %636 = vmatprep.mubr.f32.mxu0 0.0
        %637 = vmatmul.mubr.f32.gmra.mrb[0].mxu0 %v421
        %v638 = vpop.f32.mrb[0].mxu0
        %v639 = vadd.f32 %v333, %v638
        %v640 = vpop.f32.mrb[0].mxu0
        %641 = vmatprep.mubr.f32.mxu0 0.0
        %642 = vmatmul.mubr.f32.gmra.mrb[0].mxu0 %v424
        %v643 = vpop.f32.mrb[0].mxu0
        %v644 = vadd.f32 %v333, %v643
        %v645 = vpop.f32.mrb[0].mxu0
        %646 = vmatprep.mubr.f32.mxu0 0.0
        %647 = vmatmul.mubr.f32.gmra.mrb[0].mxu0 %v427
        %v648 = vpop.f32.mrb[0].mxu0
        %v649 = vadd.f32 %v333, %v648
        %v650 = vpop.f32.mrb[0].mxu0
        %651 = vmatprep.mubr.f32.mxu0 0.0
        %652 = vmatmul.mubr.f32.gmra.mrb[0].mxu0 %v430
        %v653 = vpop.f32.mrb[0].mxu0
        %v654 = vadd.f32 %v333, %v653
        %v655 = vpop.f32.mrb[0].mxu0
        %656 = vdwg.mxu0
        %v657 = vtanh.pop %v499
        %v658 = vtanh.pop %v504
        %v659 = vtanh.pop %v509
        %v660 = vtanh.pop %v514
        %v661 = vtanh.pop %v519
        %v662 = vtanh.pop %v524
        %v663 = vtanh.pop %v529
        %v664 = vtanh.pop %v534
        %v665 = vtanh.pop %v539
        %v666 = vtanh.pop %v544
        %v667 = vtanh.pop %v549
        %v668 = vtanh.pop %v554
        %v669 = vtanh.pop %v559
        %v670 = vtanh.pop %v564
        %v671 = vtanh.pop %v569
        %v672 = vtanh.pop %v574
        %v673 = vtanh.pop %v579
        %v674 = vtanh.pop %v584
        %v675 = vtanh.pop %v589
        %v676 = vtanh.pop %v594
        %v677 = vtanh.pop %v599
        %v678 = vtanh.pop %v604
        %v679 = vtanh.pop %v609
        %v680 = vtanh.pop %v614
        %v681 = vtanh.pop %v619
        %v682 = vtanh.pop %v624
        %v683 = vtanh.pop %v629
        %v684 = vtanh.pop %v634
        %v685 = vtanh.pop %v639
        %v686 = vtanh.pop %v644
        %v687 = vtanh.pop %v649
        %v688 = vtanh.pop %v654
        %689 = vst [vmem:[%s276] sm:$0xff] %v657
        %690 = vst [vmem:[%s276 + $0x8] sm:$0xff] %v658
        %691 = vst [vmem:[%s276 + $0x10] sm:$0xff] %v659
        %692 = vst [vmem:[%s276 + $0x18] sm:$0xff] %v660
        %693 = vst [vmem:[%s276 + $0x20] sm:$0xff] %v661
        %694 = vst [vmem:[%s276 + $0x28] sm:$0xff] %v662
        %695 = vst [vmem:[%s276 + $0x30] sm:$0xff] %v663
        %696 = vst [vmem:[%s276 + $0x38] sm:$0xff] %v664
        %697 = vst [vmem:[%s276 + $0x40] sm:$0xff] %v665
        %698 = vst [vmem:[%s276 + $0x48] sm:$0xff] %v666
        %699 = vst [vmem:[%s276 + $0x50] sm:$0xff] %v667
        %700 = vst [vmem:[%s276 + $0x58] sm:$0xff] %v668
        %701 = vst [vmem:[%s276 + $0x60] sm:$0xff] %v669
        %702 = vst [vmem:[%s276 + $0x68] sm:$0xff] %v670
        %703 = vst [vmem:[%s276 + $0x70] sm:$0xff] %v671
        %704 = vst [vmem:[%s276 + $0x78] sm:$0xff] %v672
        %705 = vst [vmem:[%s276 + $0x80] sm:$0xff] %v673
        %706 = vst [vmem:[%s276 + $0x88] sm:$0xff] %v674
        %707 = vst [vmem:[%s276 + $0x90] sm:$0xff] %v675
        %708 = vst [vmem:[%s276 + $0x98] sm:$0xff] %v676
        %709 = vst [vmem:[%s276 + $0xa0] sm:$0xff] %v677
        %710 = vst [vmem:[%s276 + $0xa8] sm:$0xff] %v678
        %711 = vst [vmem:[%s276 + $0xb0] sm:$0xff] %v679
        %712 = vst [vmem:[%s276 + $0xb8] sm:$0xff] %v680
        %713 = vst [vmem:[%s276 + $0xc0] sm:$0xff] %v681
        %714 = vst [vmem:[%s276 + $0xc8] sm:$0xff] %v682
        %715 = vst [vmem:[%s276 + $0xd0] sm:$0xff] %v683
        %716 = vst [vmem:[%s276 + $0xd8] sm:$0xff] %v684
        %717 = vst [vmem:[%s276 + $0xe0] sm:$0xff] %v685
        %718 = vst [vmem:[%s276 + $0xe8] sm:$0xff] %v686
        %719 = vst [vmem:[%s276 + $0xf0] sm:$0xff] %v687
        %720 = vst [vmem:[%s276 + $0xf8] sm:$0xff] %v688
        %v721 = vld [vmem:[%s276] sm:$0xff]
        %v722 = vld [vmem:[%s276 + $0x8] sm:$0xff]
        %v723 = vld [vmem:[%s276 + $0x10] sm:$0xff]
        %v724 = vld [vmem:[%s276 + $0x18] sm:$0xff]
        %v725 = vld [vmem:[%s276 + $0x20] sm:$0xff]
        %v726 = vld [vmem:[%s276 + $0x28] sm:$0xff]
        %v727 = vld [vmem:[%s276 + $0x30] sm:$0xff]
        %v728 = vld [vmem:[%s276 + $0x38] sm:$0xff]
        %v729 = vld [vmem:[%s276 + $0x40] sm:$0xff]
        %v730 = vld [vmem:[%s276 + $0x48] sm:$0xff]
        %v731 = vld [vmem:[%s276 + $0x50] sm:$0xff]
        %v732 = vld [vmem:[%s276 + $0x58] sm:$0xff]
        %v733 = vld [vmem:[%s276 + $0x60] sm:$0xff]
        %v734 = vld [vmem:[%s276 + $0x68] sm:$0xff]
        %v735 = vld [vmem:[%s276 + $0x70] sm:$0xff]
        %v736 = vld [vmem:[%s276 + $0x78] sm:$0xff]
        %v737 = vld [vmem:[%s276 + $0x80] sm:$0xff]
        %v738 = vld [vmem:[%s276 + $0x88] sm:$0xff]
        %v739 = vld [vmem:[%s276 + $0x90] sm:$0xff]
        %v740 = vld [vmem:[%s276 + $0x98] sm:$0xff]
        %v741 = vld [vmem:[%s276 + $0xa0] sm:$0xff]
        %v742 = vld [vmem:[%s276 + $0xa8] sm:$0xff]
        %v743 = vld [vmem:[%s276 + $0xb0] sm:$0xff]
        %v744 = vld [vmem:[%s276 + $0xb8] sm:$0xff]
        %v745 = vld [vmem:[%s276 + $0xc0] sm:$0xff]
        %v746 = vld [vmem:[%s276 + $0xc8] sm:$0xff]
        %v747 = vld [vmem:[%s276 + $0xd0] sm:$0xff]
        %v748 = vld [vmem:[%s276 + $0xd8] sm:$0xff]
        %v749 = vld [vmem:[%s276 + $0xe0] sm:$0xff]
        %v750 = vld [vmem:[%s276 + $0xe8] sm:$0xff]
        %v751 = vld [vmem:[%s276 + $0xf0] sm:$0xff]
        %v752 = vld [vmem:[%s276 + $0xf8] sm:$0xff]
        %v753 = vld [vmem:[%s3] sm:$0xff]
        %754 = vmatprep.subr.mxu0 0.0
        %755 = vmatpush1.xpose.msra.mxu0 %v721
        %756 = vmatprep.subr.mxu0 0.0
        %757 = vmatpush1.xpose.msra.mxu0 %v722
        %758 = vmatprep.subr.mxu0 0.0
        %759 = vmatpush1.xpose.msra.mxu0 %v723
        %760 = vmatprep.subr.mxu0 0.0
        %761 = vmatpush1.xpose.msra.mxu0 %v724
        %762 = vmatprep.subr.mxu0 0.0
        %763 = vmatpush1.xpose.msra.mxu0 %v725
        %764 = vmatprep.subr.mxu0 0.0
        %765 = vmatpush1.xpose.msra.mxu0 %v726
        %766 = vmatprep.subr.mxu0 0.0
        %767 = vmatpush1.xpose.msra.mxu0 %v727
        %768 = vmatprep.subr.mxu0 0.0
        %769 = vmatpush1.xpose.msra.mxu0 %v728
        %770 = vmatprep.subr.mxu0 0.0
        %771 = vmatpush1.xpose.msra.mxu0 %v729
        %772 = vmatprep.subr.mxu0 0.0
        %773 = vmatpush1.xpose.msra.mxu0 %v730
        %774 = vmatprep.subr.mxu0 0.0
        %775 = vmatpush1.xpose.msra.mxu0 %v731
        %776 = vmatprep.subr.mxu0 0.0
        %777 = vmatpush1.xpose.msra.mxu0 %v732
        %778 = vmatprep.subr.mxu0 0.0
        %779 = vmatpush1.xpose.msra.mxu0 %v733
        %780 = vmatprep.subr.mxu0 0.0
        %781 = vmatpush1.xpose.msra.mxu0 %v734
        %782 = vmatprep.subr.mxu0 0.0
        %783 = vmatpush1.xpose.msra.mxu0 %v735
        %784 = vmatprep.subr.mxu0 0.0
        %785 = vmatpush1.xpose.msra.mxu0 %v736
        %786 = vmatprep.subr.mxu0 0.0
        %787 = vmatpush1.xpose.msra.mxu0 %v737
        %788 = vmatprep.subr.mxu0 0.0
        %789 = vmatpush1.xpose.msra.mxu0 %v738
        %790 = vmatprep.subr.mxu0 0.0
        %791 = vmatpush1.xpose.msra.mxu0 %v739
        %792 = vmatprep.subr.mxu0 0.0
        %793 = vmatpush1.xpose.msra.mxu0 %v740
        %794 = vmatprep.subr.mxu0 0.0
        %795 = vmatpush1.xpose.msra.mxu0 %v741
        %796 = vmatprep.subr.mxu0 0.0
        %797 = vmatpush1.xpose.msra.mxu0 %v742
        %798 = vmatprep.subr.mxu0 0.0
        %799 = vmatpush1.xpose.msra.mxu0 %v743
        %800 = vmatprep.subr.mxu0 0.0
        %801 = vmatpush1.xpose.msra.mxu0 %v744
        %802 = vmatprep.subr.mxu0 0.0
        %803 = vmatpush1.xpose.msra.mxu0 %v745
        %804 = vmatprep.subr.mxu0 0.0
        %805 = vmatpush1.xpose.msra.mxu0 %v746
        %806 = vmatprep.subr.mxu0 0.0
        %807 = vmatpush1.xpose.msra.mxu0 %v747
        %808 = vmatprep.subr.mxu0 0.0
        %809 = vmatpush1.xpose.msra.mxu0 %v748
        %810 = vmatprep.subr.mxu0 0.0
        %811 = vmatpush1.xpose.msra.mxu0 %v749
        %812 = vmatprep.subr.mxu0 0.0
        %813 = vmatpush1.xpose.msra.mxu0 %v750
        %814 = vmatprep.subr.mxu0 0.0
        %815 = vmatpush1.xpose.msra.mxu0 %v751
        %816 = vmatprep.subr.mxu0 0.0
        %817 = vmatpush1.xpose.msra.mxu0 %v752
        %818 = vmatprep.mubr.f32.mxu0 0.0
        %819 = vmatmul.mubr.f32.gmra.mrb[0].mxu0 %v753
        %v820 = vpop.f32.mrb[0].mxu0
        %v821 = vadd.f32 0.0, %v820
        %v822 = vpop.f32.mrb[0].mxu0
        %v823 = vadd.f32 0.0, %v822
        %824 = vdwg.mxu0
        %v825 = vld [vmem:[%s4] sm:$0xff]
        %v826 = vmul.f32 %v721, %v721
        %v827 = vmul.f32 %v722, %v722
        %v828 = vmul.f32 %v723, %v723
        %v829 = vmul.f32 %v724, %v724
        %v830 = vmul.f32 %v725, %v725
        %v831 = vmul.f32 %v726, %v726
        %v832 = vmul.f32 %v727, %v727
        %v833 = vmul.f32 %v728, %v728
        %v834 = vmul.f32 %v729, %v729
        %v835 = vmul.f32 %v730, %v730
        %v836 = vmul.f32 %v731, %v731
        %v837 = vmul.f32 %v732, %v732
        %v838 = vmul.f32 %v733, %v733
        %v839 = vmul.f32 %v734, %v734
        %v840 = vmul.f32 %v735, %v735
        %v841 = vmul.f32 %v736, %v736
        %v842 = vmul.f32 %v737, %v737
        %v843 = vmul.f32 %v738, %v738
        %v844 = vmul.f32 %v739, %v739
        %v845 = vmul.f32 %v740, %v740
        %v846 = vmul.f32 %v741, %v741
        %v847 = vmul.f32 %v742, %v742
        %v848 = vmul.f32 %v743, %v743
        %v849 = vmul.f32 %v744, %v744
        %v850 = vmul.f32 %v745, %v745
        %v851 = vmul.f32 %v746, %v746
        %v852 = vmul.f32 %v747, %v747
        %v853 = vmul.f32 %v748, %v748
        %v854 = vmul.f32 %v749, %v749
        %v855 = vmul.f32 %v750, %v750
        %v856 = vmul.f32 %v751, %v751
        %v857 = vmul.f32 %v752, %v752
        %858 = vmatprep.subr.mxu0 0.0
        %859 = vmatpush1.xpose.msra.mxu0 %v826
        %860 = vmatprep.subr.mxu0 0.0
        %861 = vmatpush1.xpose.msra.mxu0 %v827
        %862 = vmatprep.subr.mxu0 0.0
        %863 = vmatpush1.xpose.msra.mxu0 %v828
        %864 = vmatprep.subr.mxu0 0.0
        %865 = vmatpush1.xpose.msra.mxu0 %v829
        %866 = vmatprep.subr.mxu0 0.0
        %867 = vmatpush1.xpose.msra.mxu0 %v830
        %868 = vmatprep.subr.mxu0 0.0
        %869 = vmatpush1.xpose.msra.mxu0 %v831
        %870 = vmatprep.subr.mxu0 0.0
        %871 = vmatpush1.xpose.msra.mxu0 %v832
        %872 = vmatprep.subr.mxu0 0.0
        %873 = vmatpush1.xpose.msra.mxu0 %v833
        %874 = vmatprep.subr.mxu0 0.0
        %875 = vmatpush1.xpose.msra.mxu0 %v834
        %876 = vmatprep.subr.mxu0 0.0
        %877 = vmatpush1.xpose.msra.mxu0 %v835
        %878 = vmatprep.subr.mxu0 0.0
        %879 = vmatpush1.xpose.msra.mxu0 %v836
        %880 = vmatprep.subr.mxu0 0.0
        %881 = vmatpush1.xpose.msra.mxu0 %v837
        %882 = vmatprep.subr.mxu0 0.0
        %883 = vmatpush1.xpose.msra.mxu0 %v838
        %884 = vmatprep.subr.mxu0 0.0
        %885 = vmatpush1.xpose.msra.mxu0 %v839
        %886 = vmatprep.subr.mxu0 0.0
        %887 = vmatpush1.xpose.msra.mxu0 %v840
        %888 = vmatprep.subr.mxu0 0.0
        %889 = vmatpush1.xpose.msra.mxu0 %v841
        %890 = vmatprep.subr.mxu0 0.0
        %891 = vmatpush1.xpose.msra.mxu0 %v842
        %892 = vmatprep.subr.mxu0 0.0
        %893 = vmatpush1.xpose.msra.mxu0 %v843
        %894 = vmatprep.subr.mxu0 0.0
        %895 = vmatpush1.xpose.msra.mxu0 %v844
        %896 = vmatprep.subr.mxu0 0.0
        %897 = vmatpush1.xpose.msra.mxu0 %v845
        %898 = vmatprep.subr.mxu0 0.0
        %899 = vmatpush1.xpose.msra.mxu0 %v846
        %900 = vmatprep.subr.mxu0 0.0
        %901 = vmatpush1.xpose.msra.mxu0 %v847
        %902 = vmatprep.subr.mxu0 0.0
        %903 = vmatpush1.xpose.msra.mxu0 %v848
        %904 = vmatprep.subr.mxu0 0.0
        %905 = vmatpush1.xpose.msra.mxu0 %v849
        %906 = vmatprep.subr.mxu0 0.0
        %907 = vmatpush1.xpose.msra.mxu0 %v850
        %908 = vmatprep.subr.mxu0 0.0
        %909 = vmatpush1.xpose.msra.mxu0 %v851
        %910 = vmatprep.subr.mxu0 0.0
        %911 = vmatpush1.xpose.msra.mxu0 %v852
        %912 = vmatprep.subr.mxu0 0.0
        %913 = vmatpush1.xpose.msra.mxu0 %v853
        %914 = vmatprep.subr.mxu0 0.0
        %915 = vmatpush1.xpose.msra.mxu0 %v854
        %916 = vmatprep.subr.mxu0 0.0
        %917 = vmatpush1.xpose.msra.mxu0 %v855
        %918 = vmatprep.subr.mxu0 0.0
        %919 = vmatpush1.xpose.msra.mxu0 %v856
        %920 = vmatprep.subr.mxu0 0.0
        %921 = vmatpush1.xpose.msra.mxu0 %v857
        %922 = vmatprep.mubr.f32.mxu0 0.0
        %923 = vmatmul.mubr.f32.gmra.mrb[0].mxu0 %v825
        %v924 = vpop.f32.mrb[0].mxu0
        %v925 = vadd.f32 0.0, %v924
        %v926 = vpop.f32.mrb[0].mxu0
        %v927 = vadd.f32 0.0, %v926
        %928 = vdwg.mxu0
        %v929 = vld [vmem:[%s5] sm:$0xff]
        %931 = vset.pattern.permute.xlu0 0
        %932 = vperm.xlu0 %931, %v929
        %v933 = vpop.permute.xlu0 %932
        %v935 = vadd.f32 %v933, %v821
        %v936 = vadd.f32 %v933, %v823
        %v937 = vsub.f32 %v935, %v925
        %v938 = vsub.f32 %v936, %v927
        %v939 = vxor.u32 %v937, 2147483648
        %v940 = vxor.u32 %v938, 2147483648
        %v941 = vmul.f32 %v939, 1.442695
        %v942 = vpow.pop %v941
        %v943 = vmul.f32 %v940, 1.442695
        %v944 = vpow.pop %v943
        %v945 = vadd.f32 %v942, 1.0
        %v946 = vadd.f32 %v944, 1.0
        %v947 = vrcp.pop %v945
        %v948 = vmul.f32 1.0, %v947
        %v949 = vrcp.pop %v946
        %v950 = vmul.f32 1.0, %v949
        %951 = vst [vmem:[%s283] sm:$0xff] %v948
        %952 = vst [vmem:[%s283 + $0x8] sm:$0xff] %v950
        %s953 = sand.u32 %s164, 1
        %s954 = scalar_lea.sflag [#allocation3], %s953
        %s955 = sand.u32 %s164, 1
        %s956 = smul.addr %s955, 256
        %s957 = scalar_lea.vmem [#allocation2], %s956
        %s958 = sand.u32 %s190, 1
        %s959 = scalar_lea.sflag [#allocation5], %s958
        %s960 = sand.u32 %s190, 1
        %s961 = smul.addr %s960, 16
        %s962 = scalar_lea.vmem [#allocation4], %s961
        // Predicated region
        $region45: #{tpu_custom_call.1} parent=43 // pred_check
          %p963 = pneg %p174
        $region46: #{tpu_custom_call.1} parent=43 // pred_check_branch
          %965 = sbr.rel (%p963) target = $region48
        $region47: #{tpu_custom_call.1} parent=43 // pred_region
          %s966 = smul.u32 32, %s25
          %s968 = ssub.s32 4096, 4096
          %969 = vsyncadd %s954, %s968
          %s970 = smul.addr %s966, 128
          %s971 = scalar_lea.hbm %s6, %s970
          %s972 = sshll.u32 %s957, 4
          %s973 = int_to_ptr.vmem [resolvable:$true] %s972
          %978 = dma.vmem_to_hbm [thread:$0]  %s973, 4096, %s971, %s954, 128, 128, 8
        $region48: #{tpu_custom_call.1} parent=43 // pred_fallthru
          _
        // Predicated region
        $region49: #{tpu_custom_call.1} parent=43 // pred_check
          %p979 = pneg %p200
        $region50: #{tpu_custom_call.1} parent=43 // pred_check_branch
          %981 = sbr.rel (%p979) target = $region52
        $region51: #{tpu_custom_call.1} parent=43 // pred_region
          %s982 = smul.u32 2, %s25
          %s984 = ssub.s32 256, 256
          %985 = vsyncadd %s959, %s984
          %s986 = smul.addr %s982, 128
          %s987 = scalar_lea.hbm %s7, %s986
          %s989 = sshll.u32 %s962, 4
          %s990 = int_to_ptr.vmem [resolvable:$true] %s989
          %992 = dma.vmem_to_hbm [thread:$0]  %s990, 256, %s987, %s959
        $region52: #{tpu_custom_call.1} parent=43 // pred_fallthru
          _
      $region44: #{tpu_custom_call.1} parent=5 // pred_fallthru
        _
      %p993 = scmp.le.s32.totalorder 2, %s20
      // Predicated region
      $region53: #{tpu_custom_call.1} parent=5 // pred_check
        %p994 = pneg %p993
      $region54: #{tpu_custom_call.1} parent=5 // pred_check_branch
        %996 = sbr.rel (%p994) target = $region56
      $region55: #{tpu_custom_call.1} parent=5 // pred_region
        %s997 = ssub.s32 %s20, 2
        // Predicated region
        $region57: #{tpu_custom_call.1} parent=55 // pred_check
          %p998 = pneg %p180
        $region58: #{tpu_custom_call.1} parent=55 // pred_check_branch
          %1000 = sbr.rel (%p998) target = $region60
        $region59: #{tpu_custom_call.1} parent=55 // pred_region
          %s1001 = sand.u32 %s165, 1
          %s1002 = scalar_lea.sflag [#allocation3], %s1001
          %s1003 = sand.u32 %s165, 1
          %s1004 = smul.addr %s1003, 256
          %s1005 = scalar_lea.vmem [#allocation2], %s1004
          %1006 = dma.done %s1002, 4096
        $region60: #{tpu_custom_call.1} parent=55 // pred_fallthru
          _
        // Predicated region
        $region61: #{tpu_custom_call.1} parent=55 // pred_check
          %p1007 = pneg %p206
        $region62: #{tpu_custom_call.1} parent=55 // pred_check_branch
          %1009 = sbr.rel (%p1007) target = $region64
        $region63: #{tpu_custom_call.1} parent=55 // pred_region
          %s1010 = sand.u32 %s191, 1
          %s1011 = scalar_lea.sflag [#allocation5], %s1010
          %s1012 = sand.u32 %s191, 1
          %s1013 = smul.addr %s1012, 16
          %s1014 = scalar_lea.vmem [#allocation4], %s1013
          %1015 = dma.done %s1011, 256
        $region64: #{tpu_custom_call.1} parent=55 // pred_fallthru
          _
      $region56: #{tpu_custom_call.1} parent=5 // pred_fallthru
        _
    $region6: #{tpu_custom_call.1} parent=1 // loop_footer
      %s24 = sadd.s32 1, %s20
    $region7: #{tpu_custom_call.1} parent=1 // loop_footer_branch
      %19 = sbr.rel target = $region3
    $region8: #{tpu_custom_call.1} parent=1 // loop_exit
      _
    %1016 = vsyncpa [#allocation3], 1
    %s1017 = scalar_lea.sflag [#allocation3], 1
    %1018 = vsyncpa %s1017, 1
    %1019 = vsyncpa [#allocation5], 1
    %s1020 = scalar_lea.sflag [#allocation5], 1
    %1021 = vsyncpa %s1020, 1

</llo_original>
